<compile_context>
chip_gen: v7x
topology: tpu7x:2x2x1
jax: 0.10.0
libtpu: 0.0.40
codegen_flags: <defaults>
</compile_context>

<pallas_src>
import functools

import jax
import jax.numpy as jnp
from jax import lax
from jax.experimental import pallas as pl
from jax.experimental.pallas import tpu as pltpu

_EPS2 = 1e-24                                  # (1e-12)^2, torch F.normalize eps
_NT_DNUMS = (((1,), (1,)), ((), ()))           # contract last axes: A @ B.T


def _round_up(x, n):
    return (x + n - 1) // n * n


def _cosface_kernel_2d(x_ref, w_ref, labels_ref, out_ref, *,
                       s, m, training, mxu_dtype):
    """Fast path: D fits in one tile.  grid = (B/tm, C/tn)."""
    j = pl.program_id(1)                       # top-level only (compile fix)

    x = x_ref[...].astype(jnp.float32)         # (tm, tk)
    w = w_ref[...].astype(jnp.float32)         # (tn, tk), native (C, D) orientation

    # f32 row norms computed from the same tiles the MXU consumes.
    inv_x = lax.rsqrt(jnp.maximum(jnp.sum(x * x, axis=1, keepdims=True), _EPS2))
    inv_w = lax.rsqrt(jnp.maximum(jnp.sum(w * w, axis=1, keepdims=True), _EPS2))

    # Fold normalization (and the s scale) into the operands before the bf16 cast.
    x_n = (x * (inv_x * s)).astype(mxu_dtype)
    w_n = (w * inv_w).astype(mxu_dtype)

    # NT matmul on the MXU with f32 accumulation (no transpose copy anywhere).
    logits = lax.dot_general(x_n, w_n, _NT_DNUMS,
                             preferred_element_type=jnp.float32)     # (tm, tn)

    if training:                               # static Python bool
        tm, tn = logits.shape
        cols = lax.broadcasted_iota(jnp.int32, (tm, tn), 1) + j * tn
        logits = jnp.where(cols == labels_ref[...], logits - s * m, logits)

    out_ref[...] = logits.astype(out_ref.dtype)


def _cosface_kernel_3d(x_ref, w_ref, inv_x_ref, inv_w_ref, labels_ref, out_ref, *,
                       s, m, training, mxu_dtype):
    """General path: grid = (B/tm, C/tn, D/tk), reduction (features) axis last."""
    # Grid indices are read once at the top of the body -- never inside pl.when
    # closures (pl.program_id inside a cond branch breaks the fallback lowering).
    j = pl.program_id(1)
    k = pl.program_id(2)
    nk = pl.num_programs(2)

    part = lax.dot_general(x_ref[...].astype(mxu_dtype),
                           w_ref[...].astype(mxu_dtype), _NT_DNUMS,
                           preferred_element_type=jnp.float32)

    # Accumulate straight into the resident f32 output block (no scratch, no
    # separate zero-init pass).
    @pl.when(k == 0)
    def _():
        out_ref[...] = part

    @pl.when(k > 0)
    def _():
        out_ref[...] += part

    @pl.when(k == nk - 1)
    def _():
        cosine = out_ref[...] * (inv_x_ref[...] * s) * inv_w_ref[...]
        if training:
            tm, tn = cosine.shape
            cols = lax.broadcasted_iota(jnp.int32, (tm, tn), 1) + j * tn
            cosine = jnp.where(cols == labels_ref[...], cosine - s * m, cosine)
        out_ref[...] = cosine.astype(out_ref.dtype)


def _maybe_pad_cast(arr, rows_pad, cols_pad, reuse, mxu_dtype):
    """Pad to (rows_pad, cols_pad) and/or cast to the matmul dtype.

    If a padded copy must be materialised anyway, build it directly in the matmul
    dtype (halves both the copy and the kernel HBM stream).  Otherwise only cast
    when the kernel would re-stream the f32 array >= 3 times from HBM.
    """
    r, c = arr.shape
    if (rows_pad, cols_pad) != (r, c):
        buf = jnp.zeros((rows_pad, cols_pad), mxu_dtype)
        return buf.at[:r, :c].set(arr.astype(mxu_dtype))
    if reuse >= 3 and arr.dtype != mxu_dtype:
        return arr.astype(mxu_dtype)
    return arr


def cosface_forward(x, weight, labels=None, *, s=64.0, m=0.35, training=True,
                    num_centers=1, matmul_dtype=jnp.bfloat16,
                    tm_cap=512, tn_cap=1024, tk_cap=512):
    """CosFace forward.  Returns (scaled_logits, None), matching the PyTorch module."""
    if num_centers != 1:
        # TODO(synk): num_centers > 1 softmax-weighted center pooling not implemented.
        raise NotImplementedError("num_centers > 1 is not supported")

    B, D = x.shape
    C, D2 = weight.shape
    assert D == D2, (x.shape, weight.shape)
    if labels is None:
        labels = jnp.zeros((B,), jnp.int32)

    # ---- Tile selection: full-dim blocks when possible (no padding at all). ----
    if B <= tm_cap:
        tm, B_pad = B, B
    else:
        tm = tm_cap                            # multiple of 8
        B_pad = _round_up(B, tm)
    if C <= tn_cap:
        tn, C_pad = C, C
    else:
        tn = tn_cap                            # multiple of 128 (lane-dense output)
        C_pad = _round_up(C, tn)
    if D <= tk_cap:
        tk, D_pad = D, D
    else:
        tk = tk_cap                            # multiple of 128
        D_pad = _round_up(D, tk)
    single_k = (D_pad == tk)

    # v7x has two TensorCores: avoid a degenerate 1x1 parallel grid when a dim can
    # be split for free (keeps the (8,128)/full-dim block constraints intact).
    if B_pad == tm and C_pad == tn:
        if tn % 256 == 0:
            tn //= 2
        elif tm % 16 == 0:
            tm //= 2

    grid_i = B_pad // tm
    grid_j = C_pad // tn
    reuse_x = grid_j                           # times the x stream is read from HBM
    reuse_w = grid_i                           # times the weight stream is read from HBM

    x_in = _maybe_pad_cast(x, B_pad, D_pad, reuse_x, matmul_dtype)
    w_in = _maybe_pad_cast(weight, C_pad, D_pad, reuse_w, matmul_dtype)
    labels_in = jnp.full((B_pad, 1), -1, jnp.int32).at[:B, 0].set(
        labels.astype(jnp.int32).reshape(-1))

    kernel_kwargs = dict(s=float(s), m=float(m), training=bool(training),
                         mxu_dtype=matmul_dtype)

    # Cost estimate includes grid re-reads (x is read grid_j times, w grid_i times).
    x_bytes = x_in.size * x_in.dtype.itemsize
    w_bytes = w_in.size * w_in.dtype.itemsize
    out_bytes = B_pad * C_pad * 4
    cost = pl.CostEstimate(
        flops=2 * B_pad * C_pad * D_pad,
        transcendentals=0,
        bytes_accessed=x_bytes * reuse_x + w_bytes * reuse_w + out_bytes)

    # Raise the scoped-VMEM allowance only if the double-buffered working set
    # needs it (keeps v5e's smaller default and v7x's 64 MiB/TC budget happy).
    in_itemsize = max(x_in.dtype.itemsize, w_in.dtype.itemsize)
    working_set = 2 * (tm * tk + tn * tk) * in_itemsize + 2 * tm * tn * 4
    vmem_limit = (None if working_set < 6 * 2**20
                  else int(min(64 * 2**20, max(32 * 2**20, 2 * working_set))))
    cparams = pltpu.CompilerParams(
        dimension_semantics=(("parallel", "parallel") if single_k
                             else ("parallel", "parallel", "arbitrary")),
        vmem_limit_bytes=vmem_limit)

    if single_k:
        kernel = functools.partial(_cosface_kernel_2d, **kernel_kwargs)
        out = pl.pallas_call(
            kernel,
            out_shape=jax.ShapeDtypeStruct((B_pad, C_pad), jnp.float32),
            grid_spec=pltpu.PrefetchScalarGridSpec(
                num_scalar_prefetch=0,
                grid=(grid_i, grid_j),
                in_specs=[
                    pl.BlockSpec((tm, tk), lambda i, j: (i, 0)),   # x tile
                    pl.BlockSpec((tn, tk), lambda i, j: (j, 0)),   # weight (native C,D)
                    pl.BlockSpec((tm, 1), lambda i, j: (i, 0)),    # labels per row
                ],
                out_specs=pl.BlockSpec((tm, tn), lambda i, j: (i, j)),
            ),
            compiler_params=cparams,
            cost_estimate=cost,
        )(x_in, w_in, labels_in)
    else:
        # Inverse norms computed once in f32 in the wrapper (torch eps=1e-12).
        xf = x.astype(jnp.float32)
        wf = weight.astype(jnp.float32)
        inv_x = lax.rsqrt(jnp.maximum(jnp.sum(xf * xf, -1, keepdims=True), _EPS2))
        inv_w = lax.rsqrt(jnp.maximum(jnp.sum(wf * wf, -1), _EPS2))
        inv_x_in = jnp.ones((B_pad, 1), jnp.float32).at[:B, :].set(inv_x)
        inv_w_in = jnp.ones((1, C_pad), jnp.float32).at[0, :C].set(inv_w)

        kernel = functools.partial(_cosface_kernel_3d, **kernel_kwargs)
        out = pl.pallas_call(
            kernel,
            out_shape=jax.ShapeDtypeStruct((B_pad, C_pad), jnp.float32),
            grid_spec=pltpu.PrefetchScalarGridSpec(
                num_scalar_prefetch=0,
                grid=(grid_i, grid_j, D_pad // tk),
                in_specs=[
                    pl.BlockSpec((tm, tk), lambda i, j, k: (i, k)),   # x tile
                    pl.BlockSpec((tn, tk), lambda i, j, k: (j, k)),   # weight (C,D)
                    pl.BlockSpec((tm, 1), lambda i, j, k: (i, 0)),    # 1/||x||
                    pl.BlockSpec((1, tn), lambda i, j, k: (0, j)),    # 1/||w||
                    pl.BlockSpec((tm, 1), lambda i, j, k: (i, 0)),    # labels
                ],
                out_specs=pl.BlockSpec((tm, tn), lambda i, j, k: (i, j)),
            ),
            compiler_params=cparams,
            cost_estimate=cost,
        )(x_in, w_in, inv_x_in, inv_w_in, labels_in)

    if (B_pad, C_pad) != (B, C):
        out = out[:B, :C]
    return out, None


if __name__ == "__main__":
    # Small shapes consistent with the module: batch=8, in_channels=32, out_channels=16.
    B, in_channels, out_channels = 8, 32, 16
    s, m = 64.0, 0.35

    key = jax.random.PRNGKey(0)
    kx, kw, kl = jax.random.split(key, 3)
    x = jax.random.normal(kx, (B, in_channels), dtype=jnp.float32)
    limit = (6.0 / (in_channels + out_channels)) ** 0.5                 # xavier uniform
    weight = jax.random.uniform(kw, (out_channels, in_channels), jnp.float32,
                                minval=-limit, maxval=limit)
    labels = jax.random.randint(kl, (B,), 0, out_channels, dtype=jnp.int32)

    out, _ = cosface_forward(x, weight, labels, s=s, m=m, training=True)
    out = jax.block_until_ready(out)
    assert out.shape == (B, out_channels)

    # Reference 1: same recipe as the kernel (f32 norms folded into bf16 operands).
    def ref_recipe(x, w, labels):
        inv_x = lax.rsqrt(jnp.maximum(jnp.sum(x * x, -1, keepdims=True), _EPS2))
        inv_w = lax.rsqrt(jnp.maximum(jnp.sum(w * w, -1, keepdims=True), _EPS2))
        xn = (x * (inv_x * s)).astype(jnp.bfloat16)
        wn = (w * inv_w).astype(jnp.bfloat16)
        logits = jnp.dot(xn, wn.T, preferred_element_type=jnp.float32)
        one_hot = jax.nn.one_hot(labels, w.shape[0], dtype=jnp.float32)
        return logits - one_hot * (s * m)

    # Reference 2: exact f32 PyTorch semantics (loose tol: kernel uses bf16 MXU inputs).
    def ref_exact(x, w, labels):
        xn = x / jnp.maximum(jnp.linalg.norm(x, axis=-1, keepdims=True), 1e-12)
        wn = w / jnp.maximum(jnp.linalg.norm(w, axis=-1, keepdims=True), 1e-12)
        cosine = xn @ wn.T
        one_hot = jax.nn.one_hot(labels, w.shape[0], dtype=cosine.dtype)
        return (one_hot * (cosine - m) + (1.0 - one_hot) * cosine) * s

    assert jnp.allclose(out, ref_recipe(x, weight, labels), atol=5e-2, rtol=1e-3), \
        "mismatch vs recipe-matched reference"
    assert jnp.allclose(out, ref_exact(x, weight, labels), atol=1.0, rtol=0.0), \
        "mismatch vs exact f32 reference"

    # Eval mode: plain scaled cosine.
    out_eval, _ = cosface_forward(x, weight, labels, s=s, m=m, training=False)
    out_eval = jax.block_until_ready(out_eval)
    xn = x / jnp.maximum(jnp.linalg.norm(x, axis=-1, keepdims=True), 1e-12)
    wn = weight / jnp.maximum(jnp.linalg.norm(weight, axis=-1, keepdims=True), 1e-12)
    assert jnp.allclose(out_eval, (xn @ wn.T) * s, atol=1.0, rtol=0.0), \
        "mismatch in eval mode"

    print("KERNEL_OK")
</pallas_src>

<mosaic_0001>
module attributes {stable_mosaic.version = 11 : i64} {
  func.func @_cosface_kernel_2d(%arg0: i32, %arg1: i32, %arg2: memref<8x32xf32, #tpu.memory_space<vmem>>, %arg3: memref<16x32xf32, #tpu.memory_space<vmem>>, %arg4: memref<8x1xi32, #tpu.memory_space<vmem>>, %arg5: memref<8x16xf32, #tpu.memory_space<vmem>>) attributes {dimension_semantics = [#tpu.dimension_semantics<parallel>, #tpu.dimension_semantics<parallel>], iteration_bounds = array<i64: 1, 1>, scalar_prefetch = 0 : i64, scratch_operands = 0 : i64, tpu.core_type = #tpu.core_type<tc>, window_params = [{transform_indices = @transform_0, window_bounds = array<i64: 8, 32>}, {transform_indices = @transform_1, window_bounds = array<i64: 16, 32>}, {transform_indices = @transform_2, window_bounds = array<i64: 8, 1>}, {transform_indices = @transform_3, window_bounds = array<i64: 8, 16>}]} {
    %c0 = arith.constant 0 : index
    %c0_0 = arith.constant 0 : index
    %0 = vector.load %arg2[%c0, %c0_0] : memref<8x32xf32, #tpu.memory_space<vmem>>, vector<8x32xf32>
    %c0_1 = arith.constant 0 : index
    %c0_2 = arith.constant 0 : index
    %1 = vector.load %arg3[%c0_1, %c0_2] : memref<16x32xf32, #tpu.memory_space<vmem>>, vector<16x32xf32>
    %2 = arith.mulf %0, %0 : vector<8x32xf32>
    %cst = arith.constant dense<0.000000e+00> : vector<8xf32>
    %3 = vector.multi_reduction <add>, %2, %cst [1] : vector<8x32xf32> to vector<8xf32>
    %4 = vector.shape_cast %3 : vector<8xf32> to vector<8x1xf32>
    %cst_3 = arith.constant 1.000000e-24 : f32
    %5 = vector.broadcast %cst_3 : f32 to vector<8x1xf32>
    %6 = arith.maximumf %4, %5 : vector<8x1xf32>
    %7 = math.rsqrt %6 : vector<8x1xf32>
    %8 = arith.mulf %1, %1 : vector<16x32xf32>
    %cst_4 = arith.constant dense<0.000000e+00> : vector<16xf32>
    %9 = vector.multi_reduction <add>, %8, %cst_4 [1] : vector<16x32xf32> to vector<16xf32>
    %10 = vector.shape_cast %9 : vector<16xf32> to vector<16x1xf32>
    %cst_5 = arith.constant 1.000000e-24 : f32
    %11 = vector.broadcast %cst_5 : f32 to vector<16x1xf32>
    %12 = arith.maximumf %10, %11 : vector<16x1xf32>
    %13 = math.rsqrt %12 : vector<16x1xf32>
    %cst_6 = arith.constant 6.400000e+01 : f32
    %14 = vector.broadcast %cst_6 : f32 to vector<8x1xf32>
    %15 = arith.mulf %7, %14 : vector<8x1xf32>
    %16 = vector.broadcast %15 : vector<8x1xf32> to vector<8x32xf32>
    %17 = arith.mulf %0, %16 : vector<8x32xf32>
    %18 = arith.truncf %17 : vector<8x32xf32> to vector<8x32xbf16>
    %19 = vector.broadcast %13 : vector<16x1xf32> to vector<16x32xf32>
    %20 = arith.mulf %1, %19 : vector<16x32xf32>
    %21 = arith.truncf %20 : vector<16x32xf32> to vector<16x32xbf16>
    %cst_7 = arith.constant dense<0.000000e+00> : vector<8x16xf32>
    %22 = tpu.matmul %18, %21, %cst_7 {dimension_numbers = #tpu.dot_dimension_numbers<[1], [1], [0], [0], [0, 0, 1, 0], [], []>} : vector<8x32xbf16>, vector<16x32xbf16>, vector<8x16xf32> -> vector<8x16xf32>
    %23 = tpu.iota {dimensions = array<i32: 1>} : vector<8x16xi32>
    %c16_i32 = arith.constant 16 : i32
    %24 = arith.muli %arg1, %c16_i32 : i32
    %25 = vector.broadcast %24 : i32 to vector<8x16xi32>
    %26 = arith.addi %23, %25 : vector<8x16xi32>
    %c0_8 = arith.constant 0 : index
    %c0_9 = arith.constant 0 : index
    %27 = vector.load %arg4[%c0_8, %c0_9] : memref<8x1xi32, #tpu.memory_space<vmem>>, vector<8x1xi32>
    %28 = vector.broadcast %27 : vector<8x1xi32> to vector<8x16xi32>
    %29 = arith.cmpi eq, %26, %28 : vector<8x16xi32>
    %cst_10 = arith.constant 2.240000e+01 : f32
    %30 = vector.broadcast %cst_10 : f32 to vector<8x16xf32>
    %31 = arith.subf %22, %30 : vector<8x16xf32>
    %32 = arith.select %29, %31, %22 : vector<8x16xi1>, vector<8x16xf32>
    %c0_11 = arith.constant 0 : index
    %c0_12 = arith.constant 0 : index
    %33 = vector.load %arg5[%c0_11, %c0_12] : memref<8x16xf32, #tpu.memory_space<vmem>>, vector<8x16xf32>
    tpu.vector_store %arg5[%c0_11, %c0_12], %32 {strides = array<i32>} : memref<8x16xf32, #tpu.memory_space<vmem>>, vector<8x16xf32>,
    return
  }
  func.func @transform_0(%arg0: i32, %arg1: i32) -> (i32, i32) {
    %c0_i32 = arith.constant 0 : i32
    %c0_i32_0 = arith.constant 0 : i32
    return %arg0, %c0_i32 : i32, i32
  }
  func.func @transform_1(%arg0: i32, %arg1: i32) -> (i32, i32) {
    %c0_i32 = arith.constant 0 : i32
    %c0_i32_0 = arith.constant 0 : i32
    return %arg1, %c0_i32 : i32, i32
  }
  func.func @transform_2(%arg0: i32, %arg1: i32) -> (i32, i32) {
    %c0_i32 = arith.constant 0 : i32
    %c0_i32_0 = arith.constant 0 : i32
    return %arg0, %c0_i32 : i32, i32
  }
  func.func @transform_3(%arg0: i32, %arg1: i32) -> (i32, i32) {
    %c0_i32 = arith.constant 0 : i32
    return %arg0, %arg1 : i32, i32
  }
}

</mosaic_0001>

<llo_original>
// kernel: tpu_custom_call.1
$region0: #{tpu_custom_call.1}
  #allocation0 [shape = 'u32[]', space=smem, size = 0x4, offset = 0x4, fixed_abs, tag = 'smem constant byte address 0x4 - core index']
  #allocation1 [shape = 'u32[144,128]{1,0:T(1,128)}', space=vmem, size = 0x12000, scoped, tag = 'internal scratch']
  %s0 = inlined_call_operand.vmem [shape: f32[8,32], index: 0, kind: input, shape index: {}]
  %s1 = inlined_call_operand.hbm [shape: f32[16,32], index: 1, kind: input, shape index: {}]
  %s2 = inlined_call_operand.vmem [shape: s32[8,1], index: 2, kind: input, shape index: {}]
  %s3 = inlined_call_operand.hbm [shape: f32[8,16], index: 3, kind: output, shape index: {}]
  %s4 = sld [smem:[#allocation0]]
  $region26: #{tpu_custom_call.1} parent=0
    _
  %s6 = ssub.s32 1, %s4
  %s7 = scalar_select 0, %s6, %s4
  $region1: #{tpu_custom_call.1} parent=0
    #allocation2 [shape = 'u8[8192]{0}', space=vmem, size = 0x2000, scoped, tag = 'input window, operand 1, single buffered']
    #allocation3 [shape = 's32[1]{0}', space=sflag, size = 0x4, scoped, tag = 'scoped memory for tpu_custom_call.1']
    #allocation4 [shape = 's32[1]{0}', space=sflag, size = 0x4, scoped, tag = 'scoped memory for tpu_custom_call.1']
    #allocation5 [shape = 'u8[4096]{0}', space=vmem, size = 0x1000, scoped, tag = 'output window, operand 0, single buffered']
    %8 = vsyncpa [#allocation3], 0
    %9 = vsyncpa [#allocation4], 0
    // Predicated region
    $region2: #{tpu_custom_call.1} parent=1 // pred_check
      _
    $region3: #{tpu_custom_call.1} parent=1 // pred_check_branch
      %11 = sbr.rel (0) target = $region5
    $region4: #{tpu_custom_call.1} parent=1 // pred_region
      _
    $region5: #{tpu_custom_call.1} parent=1 // pred_fallthru
      _
    // Predicated region
    $region6: #{tpu_custom_call.1} parent=1 // pred_check
      _
    $region7: #{tpu_custom_call.1} parent=1 // pred_check_branch
      %13 = sbr.rel (0) target = $region9
    $region8: #{tpu_custom_call.1} parent=1 // pred_region
      %s15 = ssub.s32 256, 256
      %16 = vsyncadd [#allocation3], %s15
      %s17 = sshll.u32 [#allocation2], 4
      %s18 = int_to_ptr.vmem [resolvable:$true] %s17
      %23 = dma.hbm_to_vmem [thread:$0]  %s1, 256, %s18, [#allocation3], 128, 128, 8
    $region9: #{tpu_custom_call.1} parent=1 // pred_fallthru
      _
    // Predicated region
    $region10: #{tpu_custom_call.1} parent=1 // pred_check
      _
    $region11: #{tpu_custom_call.1} parent=1 // pred_check_branch
      %25 = sbr.rel (0) target = $region13
    $region12: #{tpu_custom_call.1} parent=1 // pred_region
      _
    $region13: #{tpu_custom_call.1} parent=1 // pred_fallthru
      _
    // Predicated region
    $region14: #{tpu_custom_call.1} parent=1 // pred_check
      _
    $region15: #{tpu_custom_call.1} parent=1 // pred_check_branch
      %27 = sbr.rel (0) target = $region17
    $region16: #{tpu_custom_call.1} parent=1 // pred_region
      %28 = dma.done [#allocation3], 256
    $region17: #{tpu_custom_call.1} parent=1 // pred_fallthru
      _
    %v30 = vld [vmem:[%s0] sm:$0xff]
    %v31 = vld [vmem:[#allocation2] sm:$0xff]
    %v32 = vld [vmem:[#allocation2 + $0x8] sm:$0xff]
    %v33 = vmul.f32 %v30, %v30
    %vm34 = vcmask 261120
    %v35 = vsel %vm34, %v33, 0.0
    %36 = vadd.xlane.f32.xlu0 %v35
    %v37 = vpop.xlane.xlu0 %36
    %v38 = vmax.f32 %v37, 1e-24
    %v39 = vrsqrt.pop %v38
    %v40 = vmul.f32 %v31, %v31
    %v41 = vmul.f32 %v32, %v32
    %v42 = vsel %vm34, %v40, 0.0
    %43 = vadd.xlane.f32.xlu0 %v42
    %v44 = vpop.xlane.xlu0 %43
    %v45 = vsel %vm34, %v41, 0.0
    %46 = vadd.xlane.f32.xlu0 %v45
    %v47 = vpop.xlane.xlu0 %46
    %v48 = vmax.f32 %v44, 1e-24
    %v49 = vmax.f32 %v47, 1e-24
    %v50 = vrsqrt.pop %v48
    %v51 = vrsqrt.pop %v49
    %v52 = vmul.f32 %v39, 64.0
    %v53 = vmul.f32 %v30, %v52
    %v54 = vpack.c.bf16 %v53, %v53
    %v55 = vmul.f32 %v31, %v50
    %v56 = vmul.f32 %v32, %v51
    %v57 = vpack.c.bf16 %v56, %v55
    %v59 = vsel %vm34, %v54, 0
    %v62 = vsel %vm34, %v57, 0
    %64 = vmatprep.subr.bf16.mxu0 0
    %65 = vmatpush1.bf16.xpose.msra.mxu0 %v62
    %66 = vmatprep.subr.bf16.mxu0 0
    %67 = vmatpush1.bf16.xpose.msra.mxu0 0
    %68 = vmatprep.subr.bf16.mxu0 0
    %69 = vmatpush1.bf16.xpose.msra.mxu0 0
    %70 = vmatprep.subr.bf16.mxu0 0
    %71 = vmatpush1.bf16.xpose.msra.mxu0 0
    %72 = vmatprep.subr.bf16.mxu0 0
    %73 = vmatpush1.bf16.xpose.msra.mxu0 0
    %74 = vmatprep.subr.bf16.mxu0 0
    %75 = vmatpush1.bf16.xpose.msra.mxu0 0
    %76 = vmatprep.subr.bf16.mxu0 0
    %77 = vmatpush1.bf16.xpose.msra.mxu0 0
    %78 = vmatprep.subr.bf16.mxu0 0
    %79 = vmatpush1.bf16.xpose.msra.mxu0 0
    %80 = vmatprep.subr.bf16.mxu0 0
    %81 = vmatpush1.bf16.xpose.msra.mxu0 0
    %82 = vmatprep.subr.bf16.mxu0 0
    %83 = vmatpush1.bf16.xpose.msra.mxu0 0
    %84 = vmatprep.subr.bf16.mxu0 0
    %85 = vmatpush1.bf16.xpose.msra.mxu0 0
    %86 = vmatprep.subr.bf16.mxu0 0
    %87 = vmatpush1.bf16.xpose.msra.mxu0 0
    %88 = vmatprep.subr.bf16.mxu0 0
    %89 = vmatpush1.bf16.xpose.msra.mxu0 0
    %90 = vmatprep.subr.bf16.mxu0 0
    %91 = vmatpush1.bf16.xpose.msra.mxu0 0
    %92 = vmatprep.subr.bf16.mxu0 0
    %93 = vmatpush1.bf16.xpose.msra.mxu0 0
    %94 = vmatprep.subr.bf16.mxu0 0
    %95 = vmatpush1.bf16.xpose.msra.mxu0 0
    %96 = vmatprep.mubr.bf16.mxu0 0
    %97 = vmatmul.mubr.bf16.gmra.mrb[0].mxu0 %v59
    %v98 = vpop.f32.mrb[0].mxu0
    %v99 = vadd.f32 0.0, %v98
    %v100 = vpop.f32.mrb[0].mxu0
    %v101 = vpop.f32.mrb[0].mxu0
    %v102 = vpop.f32.mrb[0].mxu0
    %103 = vdwg.mxu0
    %v104 = vlaneseq
    %v105 = vand.u32 %v104, 127
    %s106 = smul.u32 0, 16
    %v107 = vstv %s106
    %v108 = vadd.s32 %v105, %v107
    %v109 = vld [vmem:[%s2] sm:$0xff]
    %110 = vset.pattern.permute.xlu0 0
    %111 = vperm.xlu0 %110, %v109
    %v112 = vpop.permute.xlu0 %111
    %vm113 = vcmp.eq.s32.totalorder %v108, %v112
    %v114 = vsub.f32 %v99, 22.4
    %v115 = vsel %vm113, %v114, %v99
    %vm116 = vcmask 130048
    %117 = vst.msk [vmem:[#allocation5] sm:$0xff] %vm116, %v115
    // Predicated region
    $region18: #{tpu_custom_call.1} parent=1 // pred_check
      _
    $region19: #{tpu_custom_call.1} parent=1 // pred_check_branch
      %119 = sbr.rel (0) target = $region21
    $region20: #{tpu_custom_call.1} parent=1 // pred_region
      %s121 = ssub.s32 128, 128
      %122 = vsyncadd [#allocation4], %s121
      %s124 = sshll.u32 [#allocation5], 4
      %s125 = int_to_ptr.vmem [resolvable:$true] %s124
      %127 = dma.vmem_to_hbm [thread:$0]  %s125, 128, %s3, [#allocation4]
    $region21: #{tpu_custom_call.1} parent=1 // pred_fallthru
      _
    // Predicated region
    $region22: #{tpu_custom_call.1} parent=1 // pred_check
      _
    $region23: #{tpu_custom_call.1} parent=1 // pred_check_branch
      %129 = sbr.rel (0) target = $region25
    $region24: #{tpu_custom_call.1} parent=1 // pred_region
      %130 = dma.done [#allocation4], 128
    $region25: #{tpu_custom_call.1} parent=1 // pred_fallthru
      _
    %131 = vsyncpa [#allocation3], 1
    %132 = vsyncpa [#allocation4], 1

</llo_original>
